<compile_context>
chip_gen: v7x
topology: tpu7x:2x2x1
jax: 0.10.0
libtpu: 0.0.40
codegen_flags: <defaults>
</compile_context>

<pallas_src>
import jax
import jax.numpy as jnp
from jax.experimental import pallas as pl
from jax.experimental.pallas import tpu as pltpu

_LANE = 128          # TPU lane width (last block dim must be a multiple of 128)
_MIB = 1 << 20


# ---------------------------------------------------------------------------
# Recommended production path: pure metadata change, zero bytes moved.
# ---------------------------------------------------------------------------
def unflatten(x, C, H, W):
    N = x.shape[0]
    return x.reshape(N, C, H, W)


# ---------------------------------------------------------------------------
# Pallas path #1: materializing copy via a single HBM->HBM DMA.
# ---------------------------------------------------------------------------
def _dma_copy_kernel(x_hbm, o_hbm, sem):
    cp = pltpu.make_async_copy(x_hbm, o_hbm, sem)
    cp.start()
    cp.wait()


def unflatten_pallas(x, C, H, W):
    """Unflatten.forward as a fresh-buffer copy: HBM->HBM DMA, then free view."""
    N, F = x.shape
    assert F == C * H * W, f"expected last dim {C * H * W}, got {F}"
    itemsize = jnp.dtype(x.dtype).itemsize
    out = pl.pallas_call(
        _dma_copy_kernel,
        out_shape=jax.ShapeDtypeStruct((N, F), x.dtype),
        in_specs=[pl.BlockSpec(memory_space=pl.ANY)],
        out_specs=pl.BlockSpec(memory_space=pl.ANY),
        scratch_shapes=[pltpu.SemaphoreType.DMA(())],
        cost_estimate=pl.CostEstimate(
            flops=0, transcendentals=0,
            bytes_accessed=2 * N * F * itemsize),
    )(x)
    return out.reshape(N, C, H, W)


# ---------------------------------------------------------------------------
# Pallas path #2: VMEM-tiled copy (fusion template).
# ---------------------------------------------------------------------------
def _copy_kernel(x_ref, o_ref):
    # Identity copy of the current lane-dense block.  Replace / extend this
    # body with downstream compute so the HBM traffic pays for itself.
    o_ref[...] = x_ref[...]


def _vmem_budget():
    """(block_bytes, vmem_limit_bytes), sized per TPU generation."""
    try:
        vmem_cap = pltpu.get_tpu_info().vmem_capacity_bytes
    except Exception:
        vmem_cap = 64 * _MIB   # assume the smallest (v7x-like) VMEM if unknown
    # ~8 MiB blocks amortize the ~0.35us per-grid-step overhead (85%+ of the
    # measured copy roofline); cap at vmem_cap//8 so 4x block (double-buffered
    # input + output) stays well inside the raised scoped limit even on v7x.
    block_bytes = min(8 * _MIB, vmem_cap // 8)
    vmem_limit = min(int(vmem_cap * 3 // 4), 64 * _MIB)   # 48 MiB v7x, 64 MiB v5e/v6e
    return block_bytes, vmem_limit


def _pick_rows_per_block(rows, max_rows, sublane):
    if rows <= sublane:
        return rows                          # block dim == full array dim: legal
    # Cap so the grid has >= 2 steps when possible (keeps both v7x TensorCores
    # busy; neutral on single-core v5e / v6e).
    cap = min(max_rows, max(sublane, (rows + 1) // 2))
    cap = max(sublane, (cap // sublane) * sublane)
    # Prefer the largest multiple of `sublane` <= cap that divides `rows`
    # evenly so every store is an unmasked full-lane vst (no ragged epilogue),
    # but never shrink below ~cap/2 (per-step overhead would creep back).
    if rows % sublane == 0:
        floor_c = max(sublane, ((cap // 2) // sublane) * sublane)
        cand = cap
        while cand >= floor_c:
            if rows % cand == 0:
                return cand
            cand -= sublane
    return cap


def unflatten_pallas_tiled(x, C, H, W):
    """VMEM-tiled identity copy (lane-dense slab), generation-aware blocks."""
    N, F = x.shape
    assert F == C * H * W, f"expected last dim {C * H * W}, got {F}"
    total = N * F
    itemsize = jnp.dtype(x.dtype).itemsize
    # Dtype-aware sublane quantum: 8 rows for 32-bit, 16 for bf16, 32 for int8/fp8.
    sublane = max(8, 32 // itemsize)
    block_bytes, vmem_limit = _vmem_budget()

    if total % _LANE == 0:
        # Lane-dense (rows, 128) slab -> unmasked full-lane stores.
        rows = total // _LANE
        max_rows = max(sublane, block_bytes // (_LANE * itemsize))
        tb = _pick_rows_per_block(rows, max_rows, sublane)
        slab = x.reshape(rows, _LANE)
        grid = (pl.cdiv(rows, tb),)
        block = (tb, _LANE)
    else:
        # Non-lane-aligned total: tile over the batch dim with the full feature
        # dim as the last block dim (a full array dim is always legal).
        row_bytes = max(1, F * itemsize)
        tb_n = min(N, max(1, block_bytes // row_bytes))
        if tb_n < N:
            tb_n = (tb_n // sublane) * sublane
            if tb_n < sublane:
                tb_n = N          # too small to tile legally; take the full dim
        slab = x
        grid = (pl.cdiv(N, tb_n),)
        block = (tb_n, F)

    out = pl.pallas_call(
        _copy_kernel,
        out_shape=jax.ShapeDtypeStruct(slab.shape, slab.dtype),
        grid=grid,
        in_specs=[pl.BlockSpec(block, lambda i: (i, 0))],
        out_specs=pl.BlockSpec(block, lambda i: (i, 0)),
        cost_estimate=pl.CostEstimate(
            flops=0, transcendentals=0,
            bytes_accessed=2 * total * itemsize),
        compiler_params=pltpu.CompilerParams(
            dimension_semantics=("parallel",),
            vmem_limit_bytes=vmem_limit),
    )(slab)
    return out.reshape(N, C, H, W)


if __name__ == "__main__":
    key = jax.random.PRNGKey(0)

    def _check(N, C, H, W, subkey):
        x = jax.random.normal(subkey, (N, C * H * W), dtype=jnp.float32)
        expected = x.reshape(N, C, H, W)
        for fn in (unflatten, unflatten_pallas, unflatten_pallas_tiled):
            out = jax.block_until_ready(fn(x, C, H, W))
            assert out.shape == (N, C, H, W), (fn.__name__, out.shape)
            assert out.dtype == x.dtype, fn.__name__
            assert bool(jnp.array_equal(out, expected)), fn.__name__

    k0, k1, k2 = jax.random.split(key, 3)
    # Primary small example (lane-aligned F = 1024).
    _check(2, 4, 16, 16, k0)
    # Module default C/H/W (F = 128*7*7 = 6272, lane-aligned) at small batch.
    _check(16, 128, 7, 7, k1)
    # Non-lane-aligned total -> exercises the batch-tiled fallback.
    _check(2, 3, 5, 7, k2)

    print("KERNEL_OK")
</pallas_src>

<mosaic_0001>
module attributes {stable_mosaic.version = 11 : i64} {
  func.func @_dma_copy_kernel(%arg0: memref<2x1024xf32, #tpu.memory_space<any>>, %arg1: memref<2x1024xf32, #tpu.memory_space<any>>, %arg2: memref<!tpu.dma_semaphore, #tpu.memory_space<semaphore_mem>>) attributes {dimension_semantics = [], scalar_prefetch = 0 : i64, scratch_operands = 1 : i64, tpu.core_type = #tpu.core_type<tc>} {
    tpu.enqueue_dma source(%arg0 : memref<2x1024xf32, #tpu.memory_space<any>>) target(%arg1 : memref<2x1024xf32, #tpu.memory_space<any>>) target_semaphore(%arg2 : memref<!tpu.dma_semaphore, #tpu.memory_space<semaphore_mem>>)
    tpu.wait_dma2 semaphore(%arg2 : memref<!tpu.dma_semaphore, #tpu.memory_space<semaphore_mem>>) src(%arg0 : memref<2x1024xf32, #tpu.memory_space<any>>) dst(%arg1 : memref<2x1024xf32, #tpu.memory_space<any>>)
    return
  }
}

</mosaic_0001>

<llo_original>
// kernel: tpu_custom_call.1
$region0: #{tpu_custom_call.1}
  #allocation0 [shape = 'u32[]', space=smem, size = 0x4, offset = 0x4, fixed_abs, tag = 'smem constant byte address 0x4 - core index']
  #allocation1 [shape = 'u32[144,128]{1,0:T(1,128)}', space=vmem, size = 0x12000, scoped, tag = 'internal scratch']
  #allocation2 [shape = 's32[1]{0}', space=sflag, size = 0x4, scoped, tag = 'scratch operand']
  #allocation3 [shape = 's32[]', space=sflag, size = 0x4, offset = 0, fixed_abs, tag = 'sflag constant byte address 0x0 - dummy sync flag']
  #allocation4 [shape = 'u32[0]{0}', space=smem, size = 0, offset = 0, fixed_abs, tag = 'smem constant byte address 0x0 - null']
  %s0 = inlined_call_operand.hbm [shape: f32[2,1024], index: 0, kind: input, shape index: {}]
  %s1 = inlined_call_operand.hbm [shape: f32[2,1024], index: 1, kind: output, shape index: {}]
  %s2 = sld [smem:[#allocation0]]
  $region2: #{tpu_custom_call.1} parent=0
    _
  %s4 = ssub.s32 1, %s2
  %s5 = scalar_select 0, %s4, %s2
  %s7 = sshll.u32 1, 14
  %s8 = sxor.u32 4294967295, %s7
  %s11 = sshll.u32 3, 24
  %s12 = sxor.u32 4294967295, %s11
  %s13 = sand.u32 0, %s12
  %s15 = sor.u32 %s13, 0
  %18 = dma.general %s0, 256, %s1, [#allocation2], [#allocation3], [#allocation4], %s15, 0
  %s19 = smul.u32 2, 1
  %s20 = smul.u32 %s19, 8
  %s21 = sshll.u32 %s20, 4
  %22 = dma.done [#allocation2], %s21
  %23 = vsyncmov [#allocation2]
  %s24 = vpop.sfrf %23
  %p25 = scmp.eq.s32.totalorder %s24, 0
  %p26 = pneg %p25
  %28 = shalt.err (%p26)

</llo_original>
